<compile_context>
chip_gen: v6e
topology: v6e:2x2x1
jax: 0.10.0
libtpu: 0.0.40
codegen_flags: <defaults>
</compile_context>

<pallas_src>
import functools

import jax
import jax.numpy as jnp
from jax.experimental import pallas as pl
from jax.experimental.pallas import tpu as pltpu

LANES = 128
MAX_ROW_TILE = 4096          # 4096 x 128 f32 = 2 MiB per input per pipeline buffer


def _sublane_align(dtype):
    """Native sublane tile for a dtype: f32 -> 8, bf16/f16 -> 16, int8 -> 32."""
    return 32 // jnp.dtype(dtype).itemsize


def _dice_kernel(x_ref, t_ref, o_ref, *, chunk, chunks_full, chunks_last,
                 apply_sigmoid):
    j = pl.program_id(0)

    @pl.when(j == 0)
    def _init():
        o_ref[...] = jnp.zeros_like(o_ref)

    def accumulate(nchunks):
        def body(i, carry):
            s_pt, s_p, s_t = carry
            r = pl.multiple_of(i * chunk, chunk)
            x = x_ref[pl.ds(r, chunk), :].astype(jnp.float32)
            t = t_ref[pl.ds(r, chunk), :].astype(jnp.float32)
            if apply_sigmoid:
                # One EUP op per vreg (tanh) instead of exp + divide.
                p = jnp.tanh(x * 0.5) * 0.5 + 0.5
            else:
                p = x
            pt = p * t
            if chunk > 8:
                nb = chunk // 8
                pt = pt.reshape(nb, 8, LANES).sum(axis=0)
                p = p.reshape(nb, 8, LANES).sum(axis=0)
                t = t.reshape(nb, 8, LANES).sum(axis=0)
            return (s_pt + pt, s_p + p, s_t + t)

        zero = jnp.zeros((8, LANES), jnp.float32)
        unroll = min(8 if chunk == 8 else 4, nchunks)
        s_pt, s_p, s_t = jax.lax.fori_loop(
            0, nchunks, body, (zero, zero, zero), unroll=unroll)
        # Output block is resident across the whole (arbitrary) grid axis:
        # accumulate straight into it (no VMEM scratch, no final copy-out).
        o_ref[0] += s_pt
        o_ref[1] += s_p
        o_ref[2] += s_t

    if chunks_last == chunks_full:
        accumulate(chunks_full)
    else:
        nsteps = pl.num_programs(0)

        @pl.when(j < nsteps - 1)
        def _full_tiles():
            accumulate(chunks_full)

        @pl.when(j == nsteps - 1)
        def _last_tile():
            accumulate(chunks_last)


def dice(inputs, targets, smooth=1.0, sigmoid=True):
    """Equivalent to MyDice.forward(inputs, targets, smooth, sigmoid)."""
    x = inputs.reshape(-1)
    t = targets.reshape(-1)
    # Stream floats in their native dtype (kernel upcasts per-vreg); only
    # non-float inputs (bool / int masks) get a wrapper-side cast.
    if x.dtype not in (jnp.float32, jnp.bfloat16, jnp.float16):
        x = x.astype(jnp.float32)
    if t.dtype not in (jnp.float32, jnp.bfloat16, jnp.float16):
        t = t.astype(jnp.float32)
    n = x.shape[0]

    chunk = max(_sublane_align(x.dtype), _sublane_align(t.dtype))
    rows = n // LANES
    rows_kernel = (rows // chunk) * chunk          # kernel-processed full rows
    n_main = rows_kernel * LANES

    if rows_kernel > 0:
        # Free bitcast reshape when n is 128*chunk-aligned; for ragged n only
        # the aligned prefix goes through the kernel (tail handled below).
        x_main = x if n_main == n else x[:n_main]
        t_main = t if n_main == n else t[:n_main]
        x2 = x_main.reshape(rows_kernel, LANES)
        t2 = t_main.reshape(rows_kernel, LANES)

        r_tile = min(MAX_ROW_TILE, rows_kernel)
        num_tiles = -(-rows_kernel // r_tile)
        last_rows = rows_kernel - (num_tiles - 1) * r_tile

        kernel = functools.partial(
            _dice_kernel,
            chunk=chunk,
            chunks_full=r_tile // chunk,
            chunks_last=last_rows // chunk,
            apply_sigmoid=bool(sigmoid),
        )

        elems = rows_kernel * LANES
        cost = pl.CostEstimate(
            flops=4 * elems,
            transcendentals=elems if sigmoid else 0,
            bytes_accessed=(x2.size * x2.dtype.itemsize
                            + t2.size * t2.dtype.itemsize
                            + 3 * 8 * LANES * 4),
        )

        in_spec = pl.BlockSpec((r_tile, LANES), lambda j: (j, 0))
        partials = pl.pallas_call(
            kernel,
            out_shape=jax.ShapeDtypeStruct((3, 8, LANES), jnp.float32),
            grid_spec=pltpu.PrefetchScalarGridSpec(
                num_scalar_prefetch=0,
                grid=(num_tiles,),
                in_specs=[in_spec, in_spec],
                out_specs=pl.BlockSpec((3, 8, LANES), lambda j: (0, 0, 0)),
            ),
            compiler_params=pltpu.CompilerParams(
                dimension_semantics=("arbitrary",),
                vmem_limit_bytes=32 * 1024 * 1024,
            ),
            cost_estimate=cost,
        )(x2, t2)

        # Tiny epilogue: one cross-lane reduce of the (3, 8, 128) partials.
        sums = jnp.sum(partials, axis=(1, 2))
        intersection, p_sum, t_sum = sums[0], sums[1], sums[2]
    else:
        intersection = jnp.float32(0.0)
        p_sum = jnp.float32(0.0)
        t_sum = jnp.float32(0.0)

    # Ragged tail (< chunk*128 + 128 elements): pure-JAX, negligible.
    if n_main < n:
        xt = x[n_main:].astype(jnp.float32)
        tt = t[n_main:].astype(jnp.float32)
        pt = jax.nn.sigmoid(xt) if sigmoid else xt
        intersection = intersection + jnp.sum(pt * tt)
        p_sum = p_sum + jnp.sum(pt)
        t_sum = t_sum + jnp.sum(tt)

    return (2.0 * intersection + smooth) / (p_sum + t_sum + smooth)


if __name__ == "__main__":
    key = jax.random.PRNGKey(0)
    k1, k2 = jax.random.split(key)
    # NCHW: batch=2, channels=4, spatial=16x16
    logits = jax.random.normal(k1, (2, 4, 16, 16), dtype=jnp.float32)
    targets = (jax.random.uniform(k2, (2, 4, 16, 16)) > 0.5).astype(jnp.float32)

    out = dice(logits, targets, smooth=1.0, sigmoid=True)
    out = jax.block_until_ready(out)

    # Pure-JAX reference == MyDice.forward
    p = jax.nn.sigmoid(logits.reshape(-1))
    t = targets.reshape(-1)
    inter = jnp.sum(p * t)
    ref = (2.0 * inter + 1.0) / (jnp.sum(p) + jnp.sum(t) + 1.0)

    assert jnp.allclose(out, ref, atol=1e-4, rtol=1e-4), (out, ref)
    print("KERNEL_OK")
</pallas_src>

<mosaic_0001>
module attributes {stable_mosaic.version = 11 : i64} {
  func.func @_dice_kernel(%arg0: i32, %arg1: memref<16x128xf32, #tpu.memory_space<vmem>>, %arg2: memref<16x128xf32, #tpu.memory_space<vmem>>, %arg3: memref<3x8x128xf32, #tpu.memory_space<vmem>>) attributes {dimension_semantics = [#tpu.dimension_semantics<arbitrary>], iteration_bounds = array<i64: 1>, scalar_prefetch = 0 : i64, scratch_operands = 0 : i64, tpu.core_type = #tpu.core_type<tc>, window_params = [{transform_indices = @transform_0, window_bounds = array<i64: 16, 128>}, {transform_indices = @transform_1, window_bounds = array<i64: 16, 128>}, {pipeline_mode = #tpu.pipeline_mode<synchronous>, transform_indices = @transform_2, window_bounds = array<i64: 3, 8, 128>}]} {
    %c0_i32 = arith.constant 0 : i32
    %0 = arith.cmpi eq, %arg0, %c0_i32 : i32
    %1 = arith.extui %0 : i1 to i32
    %c0_i32_0 = arith.constant 0 : i32
    %2 = arith.cmpi ne, %1, %c0_i32_0 : i32
    scf.if %2 {
      %cst_28 = arith.constant 0.000000e+00 : f32
      %56 = vector.broadcast %cst_28 : f32 to vector<3x8x128xf32>
      %c0_29 = arith.constant 0 : index
      %c0_30 = arith.constant 0 : index
      %c0_31 = arith.constant 0 : index
      %57 = vector.load %arg3[%c0_29, %c0_30, %c0_31] : memref<3x8x128xf32, #tpu.memory_space<vmem>>, vector<3x8x128xf32>
      tpu.vector_store %arg3[%c0_29, %c0_30, %c0_31], %56 {strides = array<i32>} : memref<3x8x128xf32, #tpu.memory_space<vmem>>, vector<3x8x128xf32>,
    } else {
    }
    %cst = arith.constant 0.000000e+00 : f32
    %3 = vector.broadcast %cst : f32 to vector<8x128xf32>
    %c0_i32_1 = arith.constant 0 : i32
    %c8_i32 = arith.constant 8 : i32
    %4 = arith.muli %c0_i32_1, %c8_i32 : i32
    %5 = tpu.assume_multiple %4, 8 : i32
    %6 = arith.index_cast %5 : i32 to index
    %c0 = arith.constant 0 : index
    %7 = vector.load %arg1[%6, %c0] : memref<16x128xf32, #tpu.memory_space<vmem>>, vector<8x128xf32>
    %8 = arith.index_cast %5 : i32 to index
    %c0_2 = arith.constant 0 : index
    %9 = vector.load %arg2[%8, %c0_2] : memref<16x128xf32, #tpu.memory_space<vmem>>, vector<8x128xf32>
    %cst_3 = arith.constant 5.000000e-01 : f32
    %10 = vector.broadcast %cst_3 : f32 to vector<8x128xf32>
    %11 = arith.mulf %7, %10 : vector<8x128xf32>
    %12 = math.tanh %11 : vector<8x128xf32>
    %cst_4 = arith.constant 5.000000e-01 : f32
    %13 = vector.broadcast %cst_4 : f32 to vector<8x128xf32>
    %14 = arith.mulf %12, %13 : vector<8x128xf32>
    %cst_5 = arith.constant 5.000000e-01 : f32
    %15 = vector.broadcast %cst_5 : f32 to vector<8x128xf32>
    %16 = arith.addf %14, %15 : vector<8x128xf32>
    %17 = arith.mulf %16, %9 : vector<8x128xf32>
    %18 = arith.addf %3, %17 : vector<8x128xf32>
    %19 = arith.addf %3, %16 : vector<8x128xf32>
    %20 = arith.addf %3, %9 : vector<8x128xf32>
    %c1_i32 = arith.constant 1 : i32
    %c8_i32_6 = arith.constant 8 : i32
    %21 = arith.muli %c1_i32, %c8_i32_6 : i32
    %22 = tpu.assume_multiple %21, 8 : i32
    %23 = arith.index_cast %22 : i32 to index
    %c0_7 = arith.constant 0 : index
    %24 = vector.load %arg1[%23, %c0_7] : memref<16x128xf32, #tpu.memory_space<vmem>>, vector<8x128xf32>
    %25 = arith.index_cast %22 : i32 to index
    %c0_8 = arith.constant 0 : index
    %26 = vector.load %arg2[%25, %c0_8] : memref<16x128xf32, #tpu.memory_space<vmem>>, vector<8x128xf32>
    %cst_9 = arith.constant 5.000000e-01 : f32
    %27 = vector.broadcast %cst_9 : f32 to vector<8x128xf32>
    %28 = arith.mulf %24, %27 : vector<8x128xf32>
    %29 = math.tanh %28 : vector<8x128xf32>
    %cst_10 = arith.constant 5.000000e-01 : f32
    %30 = vector.broadcast %cst_10 : f32 to vector<8x128xf32>
    %31 = arith.mulf %29, %30 : vector<8x128xf32>
    %cst_11 = arith.constant 5.000000e-01 : f32
    %32 = vector.broadcast %cst_11 : f32 to vector<8x128xf32>
    %33 = arith.addf %31, %32 : vector<8x128xf32>
    %34 = arith.mulf %33, %26 : vector<8x128xf32>
    %35 = arith.addf %18, %34 : vector<8x128xf32>
    %36 = arith.addf %19, %33 : vector<8x128xf32>
    %37 = arith.addf %20, %26 : vector<8x128xf32>
    %c2_i32 = arith.constant 2 : i32
    %c0_12 = arith.constant 0 : index
    %c0_13 = arith.constant 0 : index
    %c0_14 = arith.constant 0 : index
    %38 = vector.load %arg3[%c0_12, %c0_13, %c0_14] : memref<3x8x128xf32, #tpu.memory_space<vmem>>, vector<1x8x128xf32>
    %39 = vector.shape_cast %38 : vector<1x8x128xf32> to vector<8x128xf32>
    %40 = arith.addf %39, %35 : vector<8x128xf32>
    %c0_15 = arith.constant 0 : index
    %c0_16 = arith.constant 0 : index
    %c0_17 = arith.constant 0 : index
    %41 = vector.load %arg3[%c0_15, %c0_16, %c0_17] : memref<3x8x128xf32, #tpu.memory_space<vmem>>, vector<1x8x128xf32>
    %42 = vector.shape_cast %41 : vector<1x8x128xf32> to vector<8x128xf32>
    %43 = vector.shape_cast %40 : vector<8x128xf32> to vector<1x8x128xf32>
    tpu.vector_store %arg3[%c0_15, %c0_16, %c0_17], %43 {strides = array<i32>} : memref<3x8x128xf32, #tpu.memory_space<vmem>>, vector<1x8x128xf32>,
    %c1 = arith.constant 1 : index
    %c0_18 = arith.constant 0 : index
    %c0_19 = arith.constant 0 : index
    %44 = vector.load %arg3[%c1, %c0_18, %c0_19] : memref<3x8x128xf32, #tpu.memory_space<vmem>>, vector<1x8x128xf32>
    %45 = vector.shape_cast %44 : vector<1x8x128xf32> to vector<8x128xf32>
    %46 = arith.addf %45, %36 : vector<8x128xf32>
    %c1_20 = arith.constant 1 : index
    %c0_21 = arith.constant 0 : index
    %c0_22 = arith.constant 0 : index
    %47 = vector.load %arg3[%c1_20, %c0_21, %c0_22] : memref<3x8x128xf32, #tpu.memory_space<vmem>>, vector<1x8x128xf32>
    %48 = vector.shape_cast %47 : vector<1x8x128xf32> to vector<8x128xf32>
    %49 = vector.shape_cast %46 : vector<8x128xf32> to vector<1x8x128xf32>
    tpu.vector_store %arg3[%c1_20, %c0_21, %c0_22], %49 {strides = array<i32>} : memref<3x8x128xf32, #tpu.memory_space<vmem>>, vector<1x8x128xf32>,
    %c2 = arith.constant 2 : index
    %c0_23 = arith.constant 0 : index
    %c0_24 = arith.constant 0 : index
    %50 = vector.load %arg3[%c2, %c0_23, %c0_24] : memref<3x8x128xf32, #tpu.memory_space<vmem>>, vector<1x8x128xf32>
    %51 = vector.shape_cast %50 : vector<1x8x128xf32> to vector<8x128xf32>
    %52 = arith.addf %51, %37 : vector<8x128xf32>
    %c2_25 = arith.constant 2 : index
    %c0_26 = arith.constant 0 : index
    %c0_27 = arith.constant 0 : index
    %53 = vector.load %arg3[%c2_25, %c0_26, %c0_27] : memref<3x8x128xf32, #tpu.memory_space<vmem>>, vector<1x8x128xf32>
    %54 = vector.shape_cast %53 : vector<1x8x128xf32> to vector<8x128xf32>
    %55 = vector.shape_cast %52 : vector<8x128xf32> to vector<1x8x128xf32>
    tpu.vector_store %arg3[%c2_25, %c0_26, %c0_27], %55 {strides = array<i32>} : memref<3x8x128xf32, #tpu.memory_space<vmem>>, vector<1x8x128xf32>,
    return
  }
  func.func @transform_0(%arg0: i32) -> (i32, i32) {
    %c0_i32 = arith.constant 0 : i32
    %c0_i32_0 = arith.constant 0 : i32
    return %arg0, %c0_i32 : i32, i32
  }
  func.func @transform_1(%arg0: i32) -> (i32, i32) {
    %c0_i32 = arith.constant 0 : i32
    %c0_i32_0 = arith.constant 0 : i32
    return %arg0, %c0_i32 : i32, i32
  }
  func.func @transform_2(%arg0: i32) -> (i32, i32, i32) {
    %c0_i32 = arith.constant 0 : i32
    %c0_i32_0 = arith.constant 0 : i32
    %c0_i32_1 = arith.constant 0 : i32
    %c0_i32_2 = arith.constant 0 : i32
    return %c0_i32, %c0_i32_0, %c0_i32_1 : i32, i32, i32
  }
}

</mosaic_0001>

<llo_original>
// kernel: tpu_custom_call.1
$region0: #{tpu_custom_call.1}
  #allocation0 [shape = 'u32[]', space=smem, size = 0x4, offset = 0x4, fixed_abs, tag = 'smem constant byte address 0x4 - core index']
  #allocation1 [shape = 'u32[144,128]{1,0:T(1,128)}', space=vmem, size = 0x12000, scoped, tag = 'internal scratch']
  %s0 = inlined_call_operand.hbm [shape: f32[16,128], index: 0, kind: input, shape index: {}]
  %s1 = inlined_call_operand.hbm [shape: f32[16,128], index: 1, kind: input, shape index: {}]
  %s2 = inlined_call_operand.hbm [shape: f32[3,8,128], index: 2, kind: output, shape index: {}]
  %s3 = sld [smem:[#allocation0]]
  $region30: #{tpu_custom_call.1} parent=0
    _
  %s5 = ssub.s32 1, %s3
  %s6 = scalar_select 0, %s5, %s3
  $region1: #{tpu_custom_call.1} parent=0
    #allocation2 [shape = 'u8[8192]{0}', space=vmem, size = 0x2000, scoped, tag = 'input window, operand 0, single buffered']
    #allocation3 [shape = 's32[1]{0}', space=sflag, size = 0x4, scoped, tag = 'scoped memory for tpu_custom_call.1']
    #allocation4 [shape = 's32[1]{0}', space=sflag, size = 0x4, scoped, tag = 'scoped memory for tpu_custom_call.1']
    #allocation5 [shape = 'u8[8192]{0}', space=vmem, size = 0x2000, scoped, tag = 'input window, operand 1, single buffered']
    #allocation6 [shape = 's32[1]{0}', space=sflag, size = 0x4, scoped, tag = 'scoped memory for tpu_custom_call.1']
    #allocation7 [shape = 'u8[12288]{0}', space=vmem, size = 0x3000, scoped, tag = 'output window, operand 0, single buffered']
    %7 = vsyncpa [#allocation3], 0
    %8 = vsyncpa [#allocation6], 0
    %9 = vsyncpa [#allocation4], 0
    // Predicated region
    $region2: #{tpu_custom_call.1} parent=1 // pred_check
      _
    $region3: #{tpu_custom_call.1} parent=1 // pred_check_branch
      %11 = sbr.rel (0) target = $region5
    $region4: #{tpu_custom_call.1} parent=1 // pred_region
      %s13 = ssub.s32 256, 256
      %14 = vsyncadd [#allocation3], %s13
      %s15 = sshll.u32 [#allocation2], 4
      %s16 = int_to_ptr.vmem [resolvable:$true] %s15
      %21 = dma.hbm_to_vmem [thread:$0]  %s0, 256, %s16, [#allocation3], 128, 128, 8
    $region5: #{tpu_custom_call.1} parent=1 // pred_fallthru
      _
    // Predicated region
    $region6: #{tpu_custom_call.1} parent=1 // pred_check
      _
    $region7: #{tpu_custom_call.1} parent=1 // pred_check_branch
      %23 = sbr.rel (0) target = $region9
    $region8: #{tpu_custom_call.1} parent=1 // pred_region
      %s25 = ssub.s32 256, 256
      %26 = vsyncadd [#allocation6], %s25
      %s27 = sshll.u32 [#allocation5], 4
      %s28 = int_to_ptr.vmem [resolvable:$true] %s27
      %33 = dma.hbm_to_vmem [thread:$0]  %s1, 256, %s28, [#allocation6], 128, 128, 8
    $region9: #{tpu_custom_call.1} parent=1 // pred_fallthru
      _
    // Predicated region
    $region10: #{tpu_custom_call.1} parent=1 // pred_check
      _
    $region11: #{tpu_custom_call.1} parent=1 // pred_check_branch
      %35 = sbr.rel (0) target = $region13
    $region12: #{tpu_custom_call.1} parent=1 // pred_region
      %36 = dma.done [#allocation3], 256
    $region13: #{tpu_custom_call.1} parent=1 // pred_fallthru
      _
    // Predicated region
    $region14: #{tpu_custom_call.1} parent=1 // pred_check
      _
    $region15: #{tpu_custom_call.1} parent=1 // pred_check_branch
      %38 = sbr.rel (0) target = $region17
    $region16: #{tpu_custom_call.1} parent=1 // pred_region
      %39 = dma.done [#allocation6], 256
    $region17: #{tpu_custom_call.1} parent=1 // pred_fallthru
      _
    %p40 = scmp.eq.s32.totalorder 0, 0
    // Predicated region
    $region18: #{tpu_custom_call.1} parent=1 // pred_check
      %p41 = pneg %p40
    $region19: #{tpu_custom_call.1} parent=1 // pred_check_branch
      %43 = sbr.rel (%p41) target = $region21
    $region20: #{tpu_custom_call.1} parent=1 // pred_region
      %44 = vst [vmem:[#allocation7] sm:$0xff] 0.0
      %45 = vst [vmem:[#allocation7 + $0x8] sm:$0xff] 0.0
      %46 = vst [vmem:[#allocation7 + $0x10] sm:$0xff] 0.0
    $region21: #{tpu_custom_call.1} parent=1 // pred_fallthru
      _
    %v47 = vld [vmem:[#allocation2] sm:$0xff]
    %v48 = vld [vmem:[#allocation5] sm:$0xff]
    %v49 = vmul.f32 %v47, 0.5
    %v50 = vtanh.pop %v49
    %v51 = vmul.f32 %v50, 0.5
    %v52 = vadd.f32 %v51, 0.5
    %v53 = vmul.f32 %v52, %v48
    %v54 = vadd.f32 %v53, 0.0
    %v55 = vadd.f32 %v52, 0.0
    %v56 = vadd.f32 %v48, 0.0
    %s57 = scalar_lea.vmem [#allocation2], 8
    %v58 = vld [vmem:[%s57] sm:$0xff]
    %s59 = scalar_lea.vmem [#allocation5], 8
    %v60 = vld [vmem:[%s59] sm:$0xff]
    %v61 = vmul.f32 %v58, 0.5
    %v62 = vtanh.pop %v61
    %v63 = vmul.f32 %v62, 0.5
    %v64 = vadd.f32 %v63, 0.5
    %v65 = vmul.f32 %v64, %v60
    %v66 = vadd.f32 %v54, %v65
    %v67 = vadd.f32 %v55, %v64
    %v68 = vadd.f32 %v56, %v60
    %v69 = vld [vmem:[#allocation7] sm:$0xff]
    %v70 = vadd.f32 %v69, %v66
    %71 = vst [vmem:[#allocation7] sm:$0xff] %v70
    %s72 = scalar_lea.vmem [#allocation7], 8
    %v73 = vld [vmem:[%s72] sm:$0xff]
    %v74 = vadd.f32 %v73, %v67
    %75 = vst [vmem:[%s72] sm:$0xff] %v74
    %s76 = scalar_lea.vmem [#allocation7], 16
    %v77 = vld [vmem:[%s76] sm:$0xff]
    %v78 = vadd.f32 %v77, %v68
    %79 = vst [vmem:[%s76] sm:$0xff] %v78
    // Predicated region
    $region22: #{tpu_custom_call.1} parent=1 // pred_check
      _
    $region23: #{tpu_custom_call.1} parent=1 // pred_check_branch
      %81 = sbr.rel (0) target = $region25
    $region24: #{tpu_custom_call.1} parent=1 // pred_region
      %s83 = ssub.s32 384, 384
      %84 = vsyncadd [#allocation4], %s83
      %s85 = sshll.u32 [#allocation7], 4
      %s86 = int_to_ptr.vmem [resolvable:$true] %s85
      %91 = dma.vmem_to_hbm [thread:$0]  %s86, 384, %s2, [#allocation4], 128, 128, 8
    $region25: #{tpu_custom_call.1} parent=1 // pred_fallthru
      _
    // Predicated region
    $region26: #{tpu_custom_call.1} parent=1 // pred_check
      _
    $region27: #{tpu_custom_call.1} parent=1 // pred_check_branch
      %93 = sbr.rel (0) target = $region29
    $region28: #{tpu_custom_call.1} parent=1 // pred_region
      %94 = dma.done [#allocation4], 384
    $region29: #{tpu_custom_call.1} parent=1 // pred_fallthru
      _
    %95 = vsyncpa [#allocation3], 1
    %96 = vsyncpa [#allocation6], 1
    %97 = vsyncpa [#allocation4], 1

</llo_original>
